<compile_context>
chip_gen: v5e
topology: v5e:2x2
jax: 0.10.0
libtpu: 0.0.40
codegen_flags: <defaults>
</compile_context>

<pallas_src>
import functools
import math

import jax
import jax.numpy as jnp
from jax.experimental import pallas as pl
from jax.experimental.pallas import tpu as pltpu


# ---------------------------------------------------------------- kernel code

def _layernorm(v, gamma, beta, eps=1e-5):
    # torch.nn.LayerNorm: biased variance, eps inside the sqrt.
    mu = jnp.mean(v, axis=-1, keepdims=True)
    var = jnp.mean((v - mu) ** 2, axis=-1, keepdims=True)
    return (v - mu) * jax.lax.rsqrt(var + eps) * gamma + beta


def _gelu_exact(v):
    # torch.nn.GELU() default = exact erf formulation.
    return 0.5 * v * (1.0 + jax.lax.erf(v * (1.0 / math.sqrt(2.0))))


def encoder_block_kernel(x_ref, wq_ref, wo_ref, w1_ref, b1_ref, w2_ref, vec_ref,
                         o_ref, *, num_heads, matmul_dtype, approx_recip):
    """One batch element per grid step; weights resident across steps."""
    _, S, E = x_ref.shape
    H = w1_ref.shape[1]
    nh = num_heads
    dh = E // nh
    scale = 1.0 / math.sqrt(dh)
    mdt = matmul_dtype
    f32 = jnp.float32

    def matmul(a, b):          # a @ b, f32 accumulation on the MXU
        return jax.lax.dot_general(a, b, (((1,), (0,)), ((), ())),
                                   preferred_element_type=f32)

    def matmul_nt(a, b):       # a @ b.T without materializing the transpose
        return jax.lax.dot_general(a, b, (((1,), (1,)), ((), ())),
                                   preferred_element_type=f32)

    # ---- load + single cast of every operand (cast once, outside matmuls)
    x = x_ref[0].astype(f32)                              # (S, E)
    xm = x.astype(mdt)
    wq = wq_ref[...].astype(mdt)                          # (E, E)
    wo = wo_ref[...].astype(mdt)                          # (E, E)
    w1 = w1_ref[...].astype(mdt)                          # (E, H)
    w2 = w2_ref[...].astype(mdt)                          # (H, E)
    b1 = b1_ref[...].astype(f32)                          # (1, H)

    vec = vec_ref[...].astype(f32)                        # (7, E) packed vectors
    bq, bo = vec[0:1], vec[1:2]
    g1, be1 = vec[2:3], vec[3:4]
    b2, g2, be2 = vec[4:5], vec[5:6], vec[6:7]

    # ---- multi-head self-attention (q = k = v = Wq(x), faithful to reference)
    q = matmul(xm, wq) + bq                               # (S, E) f32
    qm = q.astype(mdt)                                    # key / value operand
    qs = (q * scale).astype(mdt)                          # pre-scaled query operand

    ctx_heads = []
    for h in range(nh):                                   # static unroll, nh small
        lo, hi = h * dh, (h + 1) * dh
        qs_h = qs[:, lo:hi]                               # (S, dh) static lane slice
        qm_h = qm[:, lo:hi]
        s_h = matmul_nt(qs_h, qm_h)                       # (S, S)
        s_h = s_h - jnp.max(s_h, axis=-1, keepdims=True)
        p_h = jnp.exp(s_h)
        denom = jnp.sum(p_h, axis=-1, keepdims=True)
        if approx_recip:
            # EUP vrcp: ~1e-3 relative error; not bit-identical to torch.softmax.
            p_h = p_h * pl.reciprocal(denom, approx=True)
        else:
            p_h = p_h / denom
        ctx_heads.append(matmul(p_h.astype(mdt), qm_h))   # (S, dh)

    ctx = jnp.concatenate(ctx_heads, axis=-1).astype(mdt)  # head concat -> (S, E)
    mha = matmul(ctx, wo) + bo                              # single Wo matmul, K = E

    # ---- AddNorm 1
    y = _layernorm(mha + x, g1, be1)

    # ---- FFN: Linear -> GELU(exact erf) -> Linear
    h1 = _gelu_exact(matmul(y.astype(mdt), w1) + b1)        # (S, H)
    ffn = matmul(h1.astype(mdt), w2) + b2                   # (S, E)

    # ---- AddNorm 2
    out = _layernorm(ffn + y, g2, be2)
    o_ref[0] = out.astype(o_ref.dtype)


# ------------------------------------------------------------------- wrapper

def transformer_encoder_block(x, params, num_heads, *, matmul_dtype=jnp.float32,
                              approx_recip=True):
    B, S, E = x.shape
    H = params["w1"].shape[1]
    assert E % num_heads == 0

    # Pack the seven (1, E) per-channel vectors into one (7, E) operand
    # (fewer DMA descriptors / BlockSpecs): [bq, bo, g1, be1, b2, g2, be2].
    vec = jnp.concatenate([params["bq"], params["bo"], params["g1"],
                           params["be1"], params["b2"], params["g2"],
                           params["be2"]], axis=0)

    def resident(shape):
        zeros = (0,) * len(shape)
        return pl.BlockSpec(shape, lambda b, _z=zeros: _z)   # constant -> stays in VMEM

    kernel = functools.partial(encoder_block_kernel, num_heads=num_heads,
                               matmul_dtype=matmul_dtype, approx_recip=approx_recip)
    return pl.pallas_call(
        kernel,
        out_shape=jax.ShapeDtypeStruct((B, S, E), x.dtype),
        grid=(B,),                                   # one batch element per step
        in_specs=[
            pl.BlockSpec((1, S, E), lambda b: (b, 0, 0)),   # x tile
            resident((E, E)),                                # Wq
            resident((E, E)),                                # Wo
            resident((E, H)),                                # ffn W1
            resident((1, H)),                                # ffn b1
            resident((H, E)),                                # ffn W2
            resident((7, E)),                                # packed bias/LN vectors
        ],
        out_specs=pl.BlockSpec((1, S, E), lambda b: (b, 0, 0)),
        compiler_params=pltpu.CompilerParams(
            dimension_semantics=("parallel",),       # megacore-shardable on v7x
            vmem_limit_bytes=48 * 1024 * 1024,       # explicit; < v7x 64 MiB physical
        ),
    )(x, params["wq"], params["wo"], params["w1"], params["b1"], params["w2"], vec)


# ---------------------------------------------------------- pure-JAX reference

def reference(x, p, num_heads):
    B, S, E = x.shape
    dh = E // num_heads
    q = x @ p["wq"] + p["bq"]                            # q = k = v (module quirk)
    qh = q.reshape(B, S, num_heads, dh).transpose(0, 2, 1, 3)
    scores = qh @ qh.transpose(0, 1, 3, 2) / math.sqrt(dh)
    w = jax.nn.softmax(scores, axis=-1)
    o = (w @ qh).transpose(0, 2, 1, 3).reshape(B, S, E)
    mha = o @ p["wo"] + p["bo"]

    def ln(v, g, b):
        mu = v.mean(-1, keepdims=True)
        var = ((v - mu) ** 2).mean(-1, keepdims=True)
        return (v - mu) / jnp.sqrt(var + 1e-5) * g + b

    y = ln(mha + x, p["g1"], p["be1"])
    h = jax.nn.gelu(y @ p["w1"] + p["b1"], approximate=False)
    ffn = h @ p["w2"] + p["b2"]
    return ln(ffn + y, p["g2"], p["be2"])


# ---------------------------------------------------------------------- main

if __name__ == "__main__":
    B, S, E = 2, 8, 32
    num_heads = 4
    mlp_ratio = 1
    H = mlp_ratio * E

    key = jax.random.PRNGKey(0)
    ks = jax.random.split(key, 9)
    sc = 0.1
    params = {
        "wq": sc * jax.random.normal(ks[0], (E, E), jnp.float32),
        "bq": sc * jax.random.normal(ks[1], (1, E), jnp.float32),
        # Wk / Wv exist in the PyTorch module but are unused in forward.
        "wo": sc * jax.random.normal(ks[2], (E, E), jnp.float32),
        "bo": sc * jax.random.normal(ks[3], (1, E), jnp.float32),
        "g1": jnp.ones((1, E), jnp.float32),
        "be1": jnp.zeros((1, E), jnp.float32),
        "w1": sc * jax.random.normal(ks[4], (E, H), jnp.float32),
        "b1": sc * jax.random.normal(ks[5], (1, H), jnp.float32),
        "w2": sc * jax.random.normal(ks[6], (H, E), jnp.float32),
        "b2": sc * jax.random.normal(ks[7], (1, E), jnp.float32),
        "g2": jnp.ones((1, E), jnp.float32),
        "be2": jnp.zeros((1, E), jnp.float32),
    }
    x = jax.random.normal(ks[8], (B, S, E), jnp.float32)

    ref = reference(x, params, num_heads)

    # f32 path with approx softmax reciprocal (default).
    out = jax.block_until_ready(transformer_encoder_block(x, params, num_heads))
    assert out.shape == (B, S, E)
    assert jnp.allclose(out, ref, atol=2e-3, rtol=2e-3), "f32 (approx recip) mismatch"

    # f32 path with exact reciprocal (closest to torch numerics).
    out_exact = jax.block_until_ready(
        transformer_encoder_block(x, params, num_heads, approx_recip=False))
    assert jnp.allclose(out_exact, ref, atol=2e-3, rtol=2e-3), "f32 (exact recip) mismatch"

    # bf16 MXU-operand path (v6e/v7x full-rate MXU), f32 accumulation.
    out_bf16 = jax.block_until_ready(
        transformer_encoder_block(x, params, num_heads, matmul_dtype=jnp.bfloat16))
    assert bool(jnp.all(jnp.isfinite(out_bf16)))
    assert float(jnp.max(jnp.abs(out_bf16 - ref))) < 0.05, "bf16 kernel mismatch"

    print("KERNEL_OK")
</pallas_src>

<mosaic_0001>
module attributes {stable_mosaic.version = 11 : i64} {
  func.func @encoder_block_kernel(%arg0: i32, %arg1: memref<1x8x32xf32, #tpu.memory_space<vmem>>, %arg2: memref<32x32xf32, #tpu.memory_space<vmem>>, %arg3: memref<32x32xf32, #tpu.memory_space<vmem>>, %arg4: memref<32x32xf32, #tpu.memory_space<vmem>>, %arg5: memref<1x32xf32, #tpu.memory_space<vmem>>, %arg6: memref<32x32xf32, #tpu.memory_space<vmem>>, %arg7: memref<7x32xf32, #tpu.memory_space<vmem>>, %arg8: memref<1x8x32xf32, #tpu.memory_space<vmem>>) attributes {dimension_semantics = [#tpu.dimension_semantics<parallel>], iteration_bounds = array<i64: 2>, scalar_prefetch = 0 : i64, scratch_operands = 0 : i64, tpu.core_type = #tpu.core_type<tc>, window_params = [{transform_indices = @transform_0, window_bounds = array<i64: 1, 8, 32>}, {pipeline_mode = #tpu.pipeline_mode<synchronous>, transform_indices = @transform_1, window_bounds = array<i64: 32, 32>}, {pipeline_mode = #tpu.pipeline_mode<synchronous>, transform_indices = @transform_2, window_bounds = array<i64: 32, 32>}, {pipeline_mode = #tpu.pipeline_mode<synchronous>, transform_indices = @transform_3, window_bounds = array<i64: 32, 32>}, {pipeline_mode = #tpu.pipeline_mode<synchronous>, transform_indices = @transform_4, window_bounds = array<i64: 1, 32>}, {pipeline_mode = #tpu.pipeline_mode<synchronous>, transform_indices = @transform_5, window_bounds = array<i64: 32, 32>}, {pipeline_mode = #tpu.pipeline_mode<synchronous>, transform_indices = @transform_6, window_bounds = array<i64: 7, 32>}, {transform_indices = @transform_7, window_bounds = array<i64: 1, 8, 32>}]} {
    %c0 = arith.constant 0 : index
    %c0_0 = arith.constant 0 : index
    %c0_1 = arith.constant 0 : index
    %0 = vector.load %arg1[%c0, %c0_0, %c0_1] : memref<1x8x32xf32, #tpu.memory_space<vmem>>, vector<1x8x32xf32>
    %1 = vector.shape_cast %0 : vector<1x8x32xf32> to vector<8x32xf32>
    %c0_2 = arith.constant 0 : index
    %c0_3 = arith.constant 0 : index
    %2 = vector.load %arg2[%c0_2, %c0_3] : memref<32x32xf32, #tpu.memory_space<vmem>>, vector<32x32xf32>
    %c0_4 = arith.constant 0 : index
    %c0_5 = arith.constant 0 : index
    %3 = vector.load %arg3[%c0_4, %c0_5] : memref<32x32xf32, #tpu.memory_space<vmem>>, vector<32x32xf32>
    %c0_6 = arith.constant 0 : index
    %c0_7 = arith.constant 0 : index
    %4 = vector.load %arg4[%c0_6, %c0_7] : memref<32x32xf32, #tpu.memory_space<vmem>>, vector<32x32xf32>
    %c0_8 = arith.constant 0 : index
    %c0_9 = arith.constant 0 : index
    %5 = vector.load %arg6[%c0_8, %c0_9] : memref<32x32xf32, #tpu.memory_space<vmem>>, vector<32x32xf32>
    %c0_10 = arith.constant 0 : index
    %c0_11 = arith.constant 0 : index
    %6 = vector.load %arg5[%c0_10, %c0_11] : memref<1x32xf32, #tpu.memory_space<vmem>>, vector<1x32xf32>
    %c0_12 = arith.constant 0 : index
    %c0_13 = arith.constant 0 : index
    %7 = vector.load %arg7[%c0_12, %c0_13] : memref<7x32xf32, #tpu.memory_space<vmem>>, vector<7x32xf32>
    %8 = vector.extract_strided_slice %7 {offsets = [0, 0], sizes = [1, 32], strides = [1, 1]} : vector<7x32xf32> to vector<1x32xf32>
    %9 = vector.extract_strided_slice %7 {offsets = [1, 0], sizes = [1, 32], strides = [1, 1]} : vector<7x32xf32> to vector<1x32xf32>
    %10 = vector.extract_strided_slice %7 {offsets = [2, 0], sizes = [1, 32], strides = [1, 1]} : vector<7x32xf32> to vector<1x32xf32>
    %11 = vector.extract_strided_slice %7 {offsets = [3, 0], sizes = [1, 32], strides = [1, 1]} : vector<7x32xf32> to vector<1x32xf32>
    %12 = vector.extract_strided_slice %7 {offsets = [4, 0], sizes = [1, 32], strides = [1, 1]} : vector<7x32xf32> to vector<1x32xf32>
    %13 = vector.extract_strided_slice %7 {offsets = [5, 0], sizes = [1, 32], strides = [1, 1]} : vector<7x32xf32> to vector<1x32xf32>
    %14 = vector.extract_strided_slice %7 {offsets = [6, 0], sizes = [1, 32], strides = [1, 1]} : vector<7x32xf32> to vector<1x32xf32>
    %cst = arith.constant dense<0.000000e+00> : vector<8x32xf32>
    %15 = tpu.matmul %1, %2, %cst {dimension_numbers = #tpu.dot_dimension_numbers<[1], [0], [0], [1], [0, 0, 1, 1], [], []>} : vector<8x32xf32>, vector<32x32xf32>, vector<8x32xf32> -> vector<8x32xf32>
    %16 = vector.broadcast %8 : vector<1x32xf32> to vector<8x32xf32>
    %17 = arith.addf %15, %16 : vector<8x32xf32>
    %cst_14 = arith.constant 0.353553385 : f32
    %18 = vector.broadcast %cst_14 : f32 to vector<8x32xf32>
    %19 = arith.mulf %17, %18 : vector<8x32xf32>
    %20 = vector.extract_strided_slice %19 {offsets = [0, 0], sizes = [8, 8], strides = [1, 1]} : vector<8x32xf32> to vector<8x8xf32>
    %21 = vector.extract_strided_slice %17 {offsets = [0, 0], sizes = [8, 8], strides = [1, 1]} : vector<8x32xf32> to vector<8x8xf32>
    %cst_15 = arith.constant dense<0.000000e+00> : vector<8x8xf32>
    %22 = tpu.matmul %20, %21, %cst_15 {dimension_numbers = #tpu.dot_dimension_numbers<[1], [1], [0], [0], [0, 0, 1, 0], [], []>} : vector<8x8xf32>, vector<8x8xf32>, vector<8x8xf32> -> vector<8x8xf32>
    %cst_16 = arith.constant dense<0xFF800000> : vector<8xf32>
    %23 = vector.multi_reduction <maximumf>, %22, %cst_16 [1] : vector<8x8xf32> to vector<8xf32>
    %24 = vector.shape_cast %23 : vector<8xf32> to vector<8x1xf32>
    %25 = vector.broadcast %24 : vector<8x1xf32> to vector<8x8xf32>
    %26 = arith.subf %22, %25 : vector<8x8xf32>
    %27 = math.exp %26 : vector<8x8xf32>
    %cst_17 = arith.constant dense<0.000000e+00> : vector<8xf32>
    %28 = vector.multi_reduction <add>, %27, %cst_17 [1] : vector<8x8xf32> to vector<8xf32>
    %29 = vector.shape_cast %28 : vector<8xf32> to vector<8x1xf32>
    %30 = tpu.reciprocal %29 {approx = true} : vector<8x1xf32> -> vector<8x1xf32>
    %31 = vector.broadcast %30 : vector<8x1xf32> to vector<8x8xf32>
    %32 = arith.mulf %27, %31 : vector<8x8xf32>
    %cst_18 = arith.constant dense<0.000000e+00> : vector<8x8xf32>
    %33 = tpu.matmul %32, %21, %cst_18 {dimension_numbers = #tpu.dot_dimension_numbers<[1], [0], [0], [1], [0, 0, 1, 1], [], []>} : vector<8x8xf32>, vector<8x8xf32>, vector<8x8xf32> -> vector<8x8xf32>
    %34 = vector.extract_strided_slice %19 {offsets = [0, 8], sizes = [8, 8], strides = [1, 1]} : vector<8x32xf32> to vector<8x8xf32>
    %35 = vector.extract_strided_slice %17 {offsets = [0, 8], sizes = [8, 8], strides = [1, 1]} : vector<8x32xf32> to vector<8x8xf32>
    %cst_19 = arith.constant dense<0.000000e+00> : vector<8x8xf32>
    %36 = tpu.matmul %34, %35, %cst_19 {dimension_numbers = #tpu.dot_dimension_numbers<[1], [1], [0], [0], [0, 0, 1, 0], [], []>} : vector<8x8xf32>, vector<8x8xf32>, vector<8x8xf32> -> vector<8x8xf32>
    %cst_20 = arith.constant dense<0xFF800000> : vector<8xf32>
    %37 = vector.multi_reduction <maximumf>, %36, %cst_20 [1] : vector<8x8xf32> to vector<8xf32>
    %38 = vector.shape_cast %37 : vector<8xf32> to vector<8x1xf32>
    %39 = vector.broadcast %38 : vector<8x1xf32> to vector<8x8xf32>
    %40 = arith.subf %36, %39 : vector<8x8xf32>
    %41 = math.exp %40 : vector<8x8xf32>
    %cst_21 = arith.constant dense<0.000000e+00> : vector<8xf32>
    %42 = vector.multi_reduction <add>, %41, %cst_21 [1] : vector<8x8xf32> to vector<8xf32>
    %43 = vector.shape_cast %42 : vector<8xf32> to vector<8x1xf32>
    %44 = tpu.reciprocal %43 {approx = true} : vector<8x1xf32> -> vector<8x1xf32>
    %45 = vector.broadcast %44 : vector<8x1xf32> to vector<8x8xf32>
    %46 = arith.mulf %41, %45 : vector<8x8xf32>
    %cst_22 = arith.constant dense<0.000000e+00> : vector<8x8xf32>
    %47 = tpu.matmul %46, %35, %cst_22 {dimension_numbers = #tpu.dot_dimension_numbers<[1], [0], [0], [1], [0, 0, 1, 1], [], []>} : vector<8x8xf32>, vector<8x8xf32>, vector<8x8xf32> -> vector<8x8xf32>
    %48 = vector.extract_strided_slice %19 {offsets = [0, 16], sizes = [8, 8], strides = [1, 1]} : vector<8x32xf32> to vector<8x8xf32>
    %49 = vector.extract_strided_slice %17 {offsets = [0, 16], sizes = [8, 8], strides = [1, 1]} : vector<8x32xf32> to vector<8x8xf32>
    %cst_23 = arith.constant dense<0.000000e+00> : vector<8x8xf32>
    %50 = tpu.matmul %48, %49, %cst_23 {dimension_numbers = #tpu.dot_dimension_numbers<[1], [1], [0], [0], [0, 0, 1, 0], [], []>} : vector<8x8xf32>, vector<8x8xf32>, vector<8x8xf32> -> vector<8x8xf32>
    %cst_24 = arith.constant dense<0xFF800000> : vector<8xf32>
    %51 = vector.multi_reduction <maximumf>, %50, %cst_24 [1] : vector<8x8xf32> to vector<8xf32>
    %52 = vector.shape_cast %51 : vector<8xf32> to vector<8x1xf32>
    %53 = vector.broadcast %52 : vector<8x1xf32> to vector<8x8xf32>
    %54 = arith.subf %50, %53 : vector<8x8xf32>
    %55 = math.exp %54 : vector<8x8xf32>
    %cst_25 = arith.constant dense<0.000000e+00> : vector<8xf32>
    %56 = vector.multi_reduction <add>, %55, %cst_25 [1] : vector<8x8xf32> to vector<8xf32>
    %57 = vector.shape_cast %56 : vector<8xf32> to vector<8x1xf32>
    %58 = tpu.reciprocal %57 {approx = true} : vector<8x1xf32> -> vector<8x1xf32>
    %59 = vector.broadcast %58 : vector<8x1xf32> to vector<8x8xf32>
    %60 = arith.mulf %55, %59 : vector<8x8xf32>
    %cst_26 = arith.constant dense<0.000000e+00> : vector<8x8xf32>
    %61 = tpu.matmul %60, %49, %cst_26 {dimension_numbers = #tpu.dot_dimension_numbers<[1], [0], [0], [1], [0, 0, 1, 1], [], []>} : vector<8x8xf32>, vector<8x8xf32>, vector<8x8xf32> -> vector<8x8xf32>
    %62 = vector.extract_strided_slice %19 {offsets = [0, 24], sizes = [8, 8], strides = [1, 1]} : vector<8x32xf32> to vector<8x8xf32>
    %63 = vector.extract_strided_slice %17 {offsets = [0, 24], sizes = [8, 8], strides = [1, 1]} : vector<8x32xf32> to vector<8x8xf32>
    %cst_27 = arith.constant dense<0.000000e+00> : vector<8x8xf32>
    %64 = tpu.matmul %62, %63, %cst_27 {dimension_numbers = #tpu.dot_dimension_numbers<[1], [1], [0], [0], [0, 0, 1, 0], [], []>} : vector<8x8xf32>, vector<8x8xf32>, vector<8x8xf32> -> vector<8x8xf32>
    %cst_28 = arith.constant dense<0xFF800000> : vector<8xf32>
    %65 = vector.multi_reduction <maximumf>, %64, %cst_28 [1] : vector<8x8xf32> to vector<8xf32>
    %66 = vector.shape_cast %65 : vector<8xf32> to vector<8x1xf32>
    %67 = vector.broadcast %66 : vector<8x1xf32> to vector<8x8xf32>
    %68 = arith.subf %64, %67 : vector<8x8xf32>
    %69 = math.exp %68 : vector<8x8xf32>
    %cst_29 = arith.constant dense<0.000000e+00> : vector<8xf32>
    %70 = vector.multi_reduction <add>, %69, %cst_29 [1] : vector<8x8xf32> to vector<8xf32>
    %71 = vector.shape_cast %70 : vector<8xf32> to vector<8x1xf32>
    %72 = tpu.reciprocal %71 {approx = true} : vector<8x1xf32> -> vector<8x1xf32>
    %73 = vector.broadcast %72 : vector<8x1xf32> to vector<8x8xf32>
    %74 = arith.mulf %69, %73 : vector<8x8xf32>
    %cst_30 = arith.constant dense<0.000000e+00> : vector<8x8xf32>
    %75 = tpu.matmul %74, %63, %cst_30 {dimension_numbers = #tpu.dot_dimension_numbers<[1], [0], [0], [1], [0, 0, 1, 1], [], []>} : vector<8x8xf32>, vector<8x8xf32>, vector<8x8xf32> -> vector<8x8xf32>
    %76 = tpu.concatenate %33, %47, %61, %75 in 1 : vector<8x8xf32>, vector<8x8xf32>, vector<8x8xf32>, vector<8x8xf32> -> vector<8x32xf32>
    %cst_31 = arith.constant dense<0.000000e+00> : vector<8x32xf32>
    %77 = tpu.matmul %76, %3, %cst_31 {dimension_numbers = #tpu.dot_dimension_numbers<[1], [0], [0], [1], [0, 0, 1, 1], [], []>} : vector<8x32xf32>, vector<32x32xf32>, vector<8x32xf32> -> vector<8x32xf32>
    %78 = vector.broadcast %9 : vector<1x32xf32> to vector<8x32xf32>
    %79 = arith.addf %77, %78 : vector<8x32xf32>
    %80 = arith.addf %79, %1 : vector<8x32xf32>
    %cst_32 = arith.constant dense<0.000000e+00> : vector<8xf32>
    %81 = vector.multi_reduction <add>, %80, %cst_32 [1] : vector<8x32xf32> to vector<8xf32>
    %82 = vector.shape_cast %81 : vector<8xf32> to vector<8x1xf32>
    %cst_33 = arith.constant 3.200000e+01 : f32
    %83 = vector.broadcast %cst_33 : f32 to vector<8x1xf32>
    %84 = arith.divf %82, %83 : vector<8x1xf32>
    %85 = vector.broadcast %84 : vector<8x1xf32> to vector<8x32xf32>
    %86 = arith.subf %80, %85 : vector<8x32xf32>
    %87 = arith.mulf %86, %86 : vector<8x32xf32>
    %cst_34 = arith.constant dense<0.000000e+00> : vector<8xf32>
    %88 = vector.multi_reduction <add>, %87, %cst_34 [1] : vector<8x32xf32> to vector<8xf32>
    %89 = vector.shape_cast %88 : vector<8xf32> to vector<8x1xf32>
    %cst_35 = arith.constant 3.200000e+01 : f32
    %90 = vector.broadcast %cst_35 : f32 to vector<8x1xf32>
    %91 = arith.divf %89, %90 : vector<8x1xf32>
    %92 = vector.broadcast %84 : vector<8x1xf32> to vector<8x32xf32>
    %93 = arith.subf %80, %92 : vector<8x32xf32>
    %cst_36 = arith.constant 9.99999974E-6 : f32
    %94 = vector.broadcast %cst_36 : f32 to vector<8x1xf32>
    %95 = arith.addf %91, %94 : vector<8x1xf32>
    %96 = math.rsqrt %95 : vector<8x1xf32>
    %97 = vector.broadcast %96 : vector<8x1xf32> to vector<8x32xf32>
    %98 = arith.mulf %93, %97 : vector<8x32xf32>
    %99 = vector.broadcast %10 : vector<1x32xf32> to vector<8x32xf32>
    %100 = arith.mulf %98, %99 : vector<8x32xf32>
    %101 = vector.broadcast %11 : vector<1x32xf32> to vector<8x32xf32>
    %102 = arith.addf %100, %101 : vector<8x32xf32>
    %cst_37 = arith.constant dense<0.000000e+00> : vector<8x32xf32>
    %103 = tpu.matmul %102, %4, %cst_37 {dimension_numbers = #tpu.dot_dimension_numbers<[1], [0], [0], [1], [0, 0, 1, 1], [], []>} : vector<8x32xf32>, vector<32x32xf32>, vector<8x32xf32> -> vector<8x32xf32>
    %104 = vector.broadcast %6 : vector<1x32xf32> to vector<8x32xf32>
    %105 = arith.addf %103, %104 : vector<8x32xf32>
    %cst_38 = arith.constant 5.000000e-01 : f32
    %106 = vector.broadcast %cst_38 : f32 to vector<8x32xf32>
    %107 = arith.mulf %106, %105 : vector<8x32xf32>
    %cst_39 = arith.constant 0.707106769 : f32
    %108 = vector.broadcast %cst_39 : f32 to vector<8x32xf32>
    %109 = arith.mulf %105, %108 : vector<8x32xf32>
    %110 = math.erf %109 : vector<8x32xf32>
    %cst_40 = arith.constant 1.000000e+00 : f32
    %111 = vector.broadcast %cst_40 : f32 to vector<8x32xf32>
    %112 = arith.addf %111, %110 : vector<8x32xf32>
    %113 = arith.mulf %107, %112 : vector<8x32xf32>
    %cst_41 = arith.constant dense<0.000000e+00> : vector<8x32xf32>
    %114 = tpu.matmul %113, %5, %cst_41 {dimension_numbers = #tpu.dot_dimension_numbers<[1], [0], [0], [1], [0, 0, 1, 1], [], []>} : vector<8x32xf32>, vector<32x32xf32>, vector<8x32xf32> -> vector<8x32xf32>
    %115 = vector.broadcast %12 : vector<1x32xf32> to vector<8x32xf32>
    %116 = arith.addf %114, %115 : vector<8x32xf32>
    %117 = arith.addf %116, %102 : vector<8x32xf32>
    %cst_42 = arith.constant dense<0.000000e+00> : vector<8xf32>
    %118 = vector.multi_reduction <add>, %117, %cst_42 [1] : vector<8x32xf32> to vector<8xf32>
    %119 = vector.shape_cast %118 : vector<8xf32> to vector<8x1xf32>
    %cst_43 = arith.constant 3.200000e+01 : f32
    %120 = vector.broadcast %cst_43 : f32 to vector<8x1xf32>
    %121 = arith.divf %119, %120 : vector<8x1xf32>
    %122 = vector.broadcast %121 : vector<8x1xf32> to vector<8x32xf32>
    %123 = arith.subf %117, %122 : vector<8x32xf32>
    %124 = arith.mulf %123, %123 : vector<8x32xf32>
    %cst_44 = arith.constant dense<0.000000e+00> : vector<8xf32>
    %125 = vector.multi_reduction <add>, %124, %cst_44 [1] : vector<8x32xf32> to vector<8xf32>
    %126 = vector.shape_cast %125 : vector<8xf32> to vector<8x1xf32>
    %cst_45 = arith.constant 3.200000e+01 : f32
    %127 = vector.broadcast %cst_45 : f32 to vector<8x1xf32>
    %128 = arith.divf %126, %127 : vector<8x1xf32>
    %129 = vector.broadcast %121 : vector<8x1xf32> to vector<8x32xf32>
    %130 = arith.subf %117, %129 : vector<8x32xf32>
    %cst_46 = arith.constant 9.99999974E-6 : f32
    %131 = vector.broadcast %cst_46 : f32 to vector<8x1xf32>
    %132 = arith.addf %128, %131 : vector<8x1xf32>
    %133 = math.rsqrt %132 : vector<8x1xf32>
    %134 = vector.broadcast %133 : vector<8x1xf32> to vector<8x32xf32>
    %135 = arith.mulf %130, %134 : vector<8x32xf32>
    %136 = vector.broadcast %13 : vector<1x32xf32> to vector<8x32xf32>
    %137 = arith.mulf %135, %136 : vector<8x32xf32>
    %138 = vector.broadcast %14 : vector<1x32xf32> to vector<8x32xf32>
    %139 = arith.addf %137, %138 : vector<8x32xf32>
    %c0_47 = arith.constant 0 : index
    %c0_48 = arith.constant 0 : index
    %c0_49 = arith.constant 0 : index
    %140 = vector.load %arg8[%c0_47, %c0_48, %c0_49] : memref<1x8x32xf32, #tpu.memory_space<vmem>>, vector<1x8x32xf32>
    %141 = vector.shape_cast %140 : vector<1x8x32xf32> to vector<8x32xf32>
    %142 = vector.shape_cast %139 : vector<8x32xf32> to vector<1x8x32xf32>
    tpu.vector_store %arg8[%c0_47, %c0_48, %c0_49], %142 {strides = array<i32>} : memref<1x8x32xf32, #tpu.memory_space<vmem>>, vector<1x8x32xf32>,
    return
  }
  func.func @transform_0(%arg0: i32) -> (i32, i32, i32) {
    %c0_i32 = arith.constant 0 : i32
    %c0_i32_0 = arith.constant 0 : i32
    %c0_i32_1 = arith.constant 0 : i32
    return %arg0, %c0_i32, %c0_i32_0 : i32, i32, i32
  }
  func.func @transform_1(%arg0: i32) -> (i32, i32) {
    %c0_i32 = arith.constant 0 : i32
    %c0_i32_0 = arith.constant 0 : i32
    %c0_i32_1 = arith.constant 0 : i32
    return %c0_i32, %c0_i32_0 : i32, i32
  }
  func.func @transform_2(%arg0: i32) -> (i32, i32) {
    %c0_i32 = arith.constant 0 : i32
    %c0_i32_0 = arith.constant 0 : i32
    %c0_i32_1 = arith.constant 0 : i32
    return %c0_i32, %c0_i32_0 : i32, i32
  }
  func.func @transform_3(%arg0: i32) -> (i32, i32) {
    %c0_i32 = arith.constant 0 : i32
    %c0_i32_0 = arith.constant 0 : i32
    %c0_i32_1 = arith.constant 0 : i32
    return %c0_i32, %c0_i32_0 : i32, i32
  }
  func.func @transform_4(%arg0: i32) -> (i32, i32) {
    %c0_i32 = arith.constant 0 : i32
    %c0_i32_0 = arith.constant 0 : i32
    %c0_i32_1 = arith.constant 0 : i32
    return %c0_i32, %c0_i32_0 : i32, i32
  }
  func.func @transform_5(%arg0: i32) -> (i32, i32) {
    %c0_i32 = arith.constant 0 : i32
    %c0_i32_0 = arith.constant 0 : i32
    %c0_i32_1 = arith.constant 0 : i32
    return %c0_i32, %c0_i32_0 : i32, i32
  }
  func.func @transform_6(%arg0: i32) -> (i32, i32) {
    %c0_i32 = arith.constant 0 : i32
    %c0_i32_0 = arith.constant 0 : i32
    %c0_i32_1 = arith.constant 0 : i32
    return %c0_i32, %c0_i32_0 : i32, i32
  }
  func.func @transform_7(%arg0: i32) -> (i32, i32, i32) {
    %c0_i32 = arith.constant 0 : i32
    %c0_i32_0 = arith.constant 0 : i32
    %c0_i32_1 = arith.constant 0 : i32
    return %arg0, %c0_i32, %c0_i32_0 : i32, i32, i32
  }
}

</mosaic_0001>

<llo_original>
// kernel: tpu_custom_call.1
$region0: #{tpu_custom_call.1}
  #allocation0 [shape = 'u32[]', space=smem, size = 0x4, offset = 0x4, fixed_abs, tag = 'smem constant byte address 0x4 - core index']
  #allocation1 [shape = 'u32[72,128]{1,0:T(1,128)}', space=vmem, size = 0x9000, scoped, tag = 'internal scratch']
  %s0 = inlined_call_operand.hbm [shape: f32[2,8,32], index: 0, kind: input, shape index: {}]
  %s1 = inlined_call_operand.hbm [shape: f32[32,32], index: 1, kind: input, shape index: {}]
  %s2 = inlined_call_operand.hbm [shape: f32[32,32], index: 2, kind: input, shape index: {}]
  %s3 = inlined_call_operand.hbm [shape: f32[32,32], index: 3, kind: input, shape index: {}]
  %s4 = inlined_call_operand.vmem [shape: f32[1,32], index: 4, kind: input, shape index: {}]
  %s5 = inlined_call_operand.hbm [shape: f32[32,32], index: 5, kind: input, shape index: {}]
  %s6 = inlined_call_operand.hbm [shape: f32[7,32], index: 6, kind: input, shape index: {}]
  %s7 = inlined_call_operand.hbm [shape: f32[2,8,32], index: 7, kind: output, shape index: {}]
  %s8 = sld [smem:[#allocation0]]
  $region85: #{tpu_custom_call.1} parent=0
    _
  %s10 = ssub.s32 1, %s8
  %s11 = scalar_select 0, %s10, %s8
  $region1: #{tpu_custom_call.1} parent=0
    #allocation2 [shape = 'u8[8192]{0}', space=vmem, size = 0x2000, scoped, tag = 'input window, operand 0']
    #allocation3 [shape = 's32[2]{0}', space=sflag, size = 0x8, scoped, tag = 'scoped memory for tpu_custom_call.1']
    #allocation4 [shape = 's32[2]{0}', space=sflag, size = 0x8, scoped, tag = 'scoped memory for tpu_custom_call.1']
    #allocation5 [shape = 'u8[16384]{0}', space=vmem, size = 0x4000, scoped, tag = 'input window, operand 1, single buffered']
    #allocation6 [shape = 's32[1]{0}', space=sflag, size = 0x4, scoped, tag = 'scoped memory for tpu_custom_call.1']
    #allocation7 [shape = 'u8[16384]{0}', space=vmem, size = 0x4000, scoped, tag = 'input window, operand 2, single buffered']
    #allocation8 [shape = 'u8[16384]{0}', space=vmem, size = 0x4000, scoped, tag = 'input window, operand 3, single buffered']
    #allocation9 [shape = 's32[1]{0}', space=sflag, size = 0x4, scoped, tag = 'scoped memory for tpu_custom_call.1']
    #allocation10 [shape = 'u8[16384]{0}', space=vmem, size = 0x4000, scoped, tag = 'input window, operand 5, single buffered']
    #allocation11 [shape = 'u8[4096]{0}', space=vmem, size = 0x1000, scoped, tag = 'input window, operand 6, single buffered']
    #allocation12 [shape = 's32[1]{0}', space=sflag, size = 0x4, scoped, tag = 'scoped memory for tpu_custom_call.1']
    #allocation13 [shape = 'u8[8192]{0}', space=vmem, size = 0x2000, scoped, tag = 'output window, operand 0']
    %12 = vsyncpa [#allocation3], 0
    %s13 = scalar_lea.sflag [#allocation3], 1
    %14 = vsyncpa %s13, 0
    %15 = vsyncpa [#allocation6], 0
    %16 = vsyncpa [#allocation9], 0
    %17 = vsyncpa [#allocation12], 0
    %18 = vsyncpa [#allocation4], 0
    %s19 = scalar_lea.sflag [#allocation4], 1
    %20 = vsyncpa %s19, 0
    loop: start=0, step=1, limit=4
    $region2: #{tpu_custom_call.1} parent=1 // loop_pre_header
      _
    $region3: #{tpu_custom_call.1} parent=1 // loop_header
      %s22 = sphi 0, %s26
      %p23 = scmp.ge.s32.totalorder %s22, 4
      %s32 = sphi 0, %s34
      %s35 = sphi 0, %s32
      %s36 = sphi 0, %s35
      %s52 = sphi 0, %s36
      %s56 = sphi 0, %s56
      %s58 = sphi 0, %s56
      %s59 = sphi 0, %s58
      %s73 = sphi 0, %s59
      %s77 = sphi 0, %s77
      %s79 = sphi 0, %s77
      %s80 = sphi 0, %s79
      %s94 = sphi 0, %s80
      %s98 = sphi 0, %s98
      %s100 = sphi 0, %s98
      %s101 = sphi 0, %s100
      %s115 = sphi 0, %s101
      %s119 = sphi 0, %s119
      %s121 = sphi 0, %s119
      %s122 = sphi 0, %s121
      %s136 = sphi 0, %s122
      %s140 = sphi 0, %s140
      %s142 = sphi 0, %s140
      %s143 = sphi 0, %s142
      %s157 = sphi 0, %s143
      %s161 = sphi 0, %s161
      %s163 = sphi 0, %s161
      %s164 = sphi 0, %s163
      %s178 = sphi 0, %s164
      %s184 = sphi 0, %s186
      %s187 = sphi 0, %s184
      %s188 = sphi 0, %s187
      %s204 = sphi 0, %s188
    $region4: #{tpu_custom_call.1} parent=1 // loop_header_branch
      %25 = sbr.rel (%p23) target = $region8
    $region5: #{tpu_custom_call.1} parent=1 // loop_body
      %s27 = ssub.s32 %s22, 1
      %s28 = ssub.s32 %s22, 2
      %s29 = sadd.s32 %s22, 1
      %s30 = ssub.s32 %s22, %s29
      %p31 = scmp.eq.s32.totalorder %s30, 0
      %s33 = sadd.s32 %s32, 1
      %s34 = scalar_select %p31, %s32, %s33
      %p37 = pneg %p31
      %p38 = scmp.eq.s32.totalorder %s22, 1
      %p39 = por %p37, %p38
      %p40 = scmp.ne.s32.totalorder %s32, %s35
      %p41 = scmp.eq.s32.totalorder %s22, 0
      %p42 = por %p40, %p41
      %p43 = scmp.ne.s32.totalorder %s32, %s35
      %p44 = scmp.eq.s32.totalorder %s27, 1
      %p45 = por %p43, %p44
      %p46 = scmp.ne.s32.totalorder %s35, %s36
      %p47 = scmp.eq.s32.totalorder %s27, 0
      %p48 = por %p46, %p47
      %p49 = scmp.ne.s32.totalorder %s35, %s36
      %p50 = scmp.eq.s32.totalorder %s28, 1
      %p51 = por %p49, %p50
      %p53 = scmp.ne.s32.totalorder %s36, %s52
      %p54 = scmp.eq.s32.totalorder %s28, 0
      %p55 = por %p53, %p54
      %s57 = sadd.s32 %s56, 1
      %p60 = scmp.eq.s32.totalorder %s22, 1
      %p61 = scmp.ne.s32.totalorder %s56, %s58
      %p62 = scmp.eq.s32.totalorder %s22, 0
      %p63 = por %p61, %p62
      %p64 = scmp.ne.s32.totalorder %s56, %s58
      %p65 = scmp.eq.s32.totalorder %s27, 1
      %p66 = por %p64, %p65
      %p67 = scmp.ne.s32.totalorder %s58, %s59
      %p68 = scmp.eq.s32.totalorder %s27, 0
      %p69 = por %p67, %p68
      %p70 = scmp.ne.s32.totalorder %s58, %s59
      %p71 = scmp.eq.s32.totalorder %s28, 1
      %p72 = por %p70, %p71
      %p74 = scmp.ne.s32.totalorder %s59, %s73
      %p75 = scmp.eq.s32.totalorder %s28, 0
      %p76 = por %p74, %p75
      %s78 = sadd.s32 %s77, 1
      %p81 = scmp.eq.s32.totalorder %s22, 1
      %p82 = scmp.ne.s32.totalorder %s77, %s79
      %p83 = scmp.eq.s32.totalorder %s22, 0
      %p84 = por %p82, %p83
      %p85 = scmp.ne.s32.totalorder %s77, %s79
      %p86 = scmp.eq.s32.totalorder %s27, 1
      %p87 = por %p85, %p86
      %p88 = scmp.ne.s32.totalorder %s79, %s80
      %p89 = scmp.eq.s32.totalorder %s27, 0
      %p90 = por %p88, %p89
      %p91 = scmp.ne.s32.totalorder %s79, %s80
      %p92 = scmp.eq.s32.totalorder %s28, 1
      %p93 = por %p91, %p92
      %p95 = scmp.ne.s32.totalorder %s80, %s94
      %p96 = scmp.eq.s32.totalorder %s28, 0
      %p97 = por %p95, %p96
      %s99 = sadd.s32 %s98, 1
      %p102 = scmp.eq.s32.totalorder %s22, 1
      %p103 = scmp.ne.s32.totalorder %s98, %s100
      %p104 = scmp.eq.s32.totalorder %s22, 0
      %p105 = por %p103, %p104
      %p106 = scmp.ne.s32.totalorder %s98, %s100
      %p107 = scmp.eq.s32.totalorder %s27, 1
      %p108 = por %p106, %p107
      %p109 = scmp.ne.s32.totalorder %s100, %s101
      %p110 = scmp.eq.s32.totalorder %s27, 0
      %p111 = por %p109, %p110
      %p112 = scmp.ne.s32.totalorder %s100, %s101
      %p113 = scmp.eq.s32.totalorder %s28, 1
      %p114 = por %p112, %p113
      %p116 = scmp.ne.s32.totalorder %s101, %s115
      %p117 = scmp.eq.s32.totalorder %s28, 0
      %p118 = por %p116, %p117
      %s120 = sadd.s32 %s119, 1
      %p123 = scmp.eq.s32.totalorder %s22, 1
      %p124 = scmp.ne.s32.totalorder %s119, %s121
      %p125 = scmp.eq.s32.totalorder %s22, 0
      %p126 = por %p124, %p125
      %p127 = scmp.ne.s32.totalorder %s119, %s121
      %p128 = scmp.eq.s32.totalorder %s27, 1
      %p129 = por %p127, %p128
      %p130 = scmp.ne.s32.totalorder %s121, %s122
      %p131 = scmp.eq.s32.totalorder %s27, 0
      %p132 = por %p130, %p131
      %p133 = scmp.ne.s32.totalorder %s121, %s122
      %p134 = scmp.eq.s32.totalorder %s28, 1
      %p135 = por %p133, %p134
      %p137 = scmp.ne.s32.totalorder %s122, %s136
      %p138 = scmp.eq.s32.totalorder %s28, 0
      %p139 = por %p137, %p138
      %s141 = sadd.s32 %s140, 1
      %p144 = scmp.eq.s32.totalorder %s22, 1
      %p145 = scmp.ne.s32.totalorder %s140, %s142
      %p146 = scmp.eq.s32.totalorder %s22, 0
      %p147 = por %p145, %p146
      %p148 = scmp.ne.s32.totalorder %s140, %s142
      %p149 = scmp.eq.s32.totalorder %s27, 1
      %p150 = por %p148, %p149
      %p151 = scmp.ne.s32.totalorder %s142, %s143
      %p152 = scmp.eq.s32.totalorder %s27, 0
      %p153 = por %p151, %p152
      %p154 = scmp.ne.s32.totalorder %s142, %s143
      %p155 = scmp.eq.s32.totalorder %s28, 1
      %p156 = por %p154, %p155
      %p158 = scmp.ne.s32.totalorder %s143, %s157
      %p159 = scmp.eq.s32.totalorder %s28, 0
      %p160 = por %p158, %p159
      %s162 = sadd.s32 %s161, 1
      %p165 = scmp.eq.s32.totalorder %s22, 1
      %p166 = scmp.ne.s32.totalorder %s161, %s163
      %p167 = scmp.eq.s32.totalorder %s22, 0
      %p168 = por %p166, %p167
      %p169 = scmp.ne.s32.totalorder %s161, %s163
      %p170 = scmp.eq.s32.totalorder %s27, 1
      %p171 = por %p169, %p170
      %p172 = scmp.ne.s32.totalorder %s163, %s164
      %p173 = scmp.eq.s32.totalorder %s27, 0
      %p174 = por %p172, %p173
      %p175 = scmp.ne.s32.totalorder %s163, %s164
      %p176 = scmp.eq.s32.totalorder %s28, 1
      %p177 = por %p175, %p176
      %p179 = scmp.ne.s32.totalorder %s164, %s178
      %p180 = scmp.eq.s32.totalorder %s28, 0
      %p181 = por %p179, %p180
      %s182 = ssub.s32 %s22, %s29
      %p183 = scmp.eq.s32.totalorder %s182, 0
      %s185 = sadd.s32 %s184, 1
      %s186 = scalar_select %p183, %s184, %s185
      %p189 = pneg %p183
      %p190 = scmp.eq.s32.totalorder %s22, 1
      %p191 = por %p189, %p190
      %p192 = scmp.ne.s32.totalorder %s184, %s187
      %p193 = scmp.eq.s32.totalorder %s22, 0
      %p194 = por %p192, %p193
      %p195 = scmp.ne.s32.totalorder %s184, %s187
      %p196 = scmp.eq.s32.totalorder %s27, 1
      %p197 = por %p195, %p196
      %p198 = scmp.ne.s32.totalorder %s187, %s188
      %p199 = scmp.eq.s32.totalorder %s27, 0
      %p200 = por %p198, %p199
      %p201 = scmp.ne.s32.totalorder %s187, %s188
      %p202 = scmp.eq.s32.totalorder %s28, 1
      %p203 = por %p201, %p202
      %p205 = scmp.ne.s32.totalorder %s188, %s204
      %p206 = scmp.eq.s32.totalorder %s28, 0
      %p207 = por %p205, %p206
      %p208 = scmp.le.s32.totalorder 1, %s22
      %p209 = scmp.lt.s32.totalorder %s22, 3
      %p210 = pnand %p208, %p209
      %p211 = pneg %p210
      // Predicated region
      $region9: #{tpu_custom_call.1} parent=5 // pred_check
        _
      $region10: #{tpu_custom_call.1} parent=5 // pred_check_branch
        %213 = sbr.rel (%p210) target = $region12
      $region11: #{tpu_custom_call.1} parent=5 // pred_region
        %s214 = ssub.s32 %s22, 1
        // Predicated region
        $region13: #{tpu_custom_call.1} parent=11 // pred_check
          %p215 = pneg %p69
        $region14: #{tpu_custom_call.1} parent=11 // pred_check_branch
          %217 = sbr.rel (%p215) target = $region16
        $region15: #{tpu_custom_call.1} parent=11 // pred_region
          %219 = vsyncadd [#allocation6], 0
          %s220 = sshll.u32 %s1, 4
          %s221 = int_to_ptr.hbm [resolvable:$true] %s220
          %s222 = sshll.u32 [#allocation5], 4
          %s223 = int_to_ptr.vmem [resolvable:$true] %s222
          %228 = dma.hbm_to_vmem [thread:$0]  %s221, 512, %s223, [#allocation6], 128, 128, 8
        $region16: #{tpu_custom_call.1} parent=11 // pred_fallthru
          _
        // Predicated region
        $region17: #{tpu_custom_call.1} parent=11 // pred_check
          %p229 = pneg %p90
        $region18: #{tpu_custom_call.1} parent=11 // pred_check_branch
          %231 = sbr.rel (%p229) target = $region20
        $region19: #{tpu_custom_call.1} parent=11 // pred_region
          %233 = vsyncadd [#allocation6], 0
          %s234 = sshll.u32 %s2, 4
          %s235 = int_to_ptr.hbm [resolvable:$true] %s234
          %s236 = sshll.u32 [#allocation7], 4
          %s237 = int_to_ptr.vmem [resolvable:$true] %s236
          %242 = dma.hbm_to_vmem [thread:$0]  %s235, 512, %s237, [#allocation6], 128, 128, 8
        $region20: #{tpu_custom_call.1} parent=11 // pred_fallthru
          _
        // Predicated region
        $region21: #{tpu_custom_call.1} parent=11 // pred_check
          %p243 = pneg %p111
        $region22: #{tpu_custom_call.1} parent=11 // pred_check_branch
          %245 = sbr.rel (%p243) target = $region24
        $region23: #{tpu_custom_call.1} parent=11 // pred_region
          %247 = vsyncadd [#allocation9], 0
          %s248 = sshll.u32 %s3, 4
          %s249 = int_to_ptr.hbm [resolvable:$true] %s248
          %s250 = sshll.u32 [#allocation8], 4
          %s251 = int_to_ptr.vmem [resolvable:$true] %s250
          %256 = dma.hbm_to_vmem [thread:$0]  %s249, 512, %s251, [#allocation9], 128, 128, 8
        $region24: #{tpu_custom_call.1} parent=11 // pred_fallthru
          _
        // Predicated region
        $region25: #{tpu_custom_call.1} parent=11 // pred_check
          %p257 = pneg %p132
        $region26: #{tpu_custom_call.1} parent=11 // pred_check_branch
          %259 = sbr.rel (%p257) target = $region28
        $region27: #{tpu_custom_call.1} parent=11 // pred_region
          _
        $region28: #{tpu_custom_call.1} parent=11 // pred_fallthru
          _
        // Predicated region
        $region29: #{tpu_custom_call.1} parent=11 // pred_check
          %p260 = pneg %p153
        $region30: #{tpu_custom_call.1} parent=11 // pred_check_branch
          %262 = sbr.rel (%p260) target = $region32
        $region31: #{tpu_custom_call.1} parent=11 // pred_region
          %264 = vsyncadd [#allocation9], 0
          %s265 = sshll.u32 %s5, 4
          %s266 = int_to_ptr.hbm [resolvable:$true] %s265
          %s267 = sshll.u32 [#allocation10], 4
          %s268 = int_to_ptr.vmem [resolvable:$true] %s267
          %273 = dma.hbm_to_vmem [thread:$0]  %s266, 512, %s268, [#allocation9], 128, 128, 8
        $region32: #{tpu_custom_call.1} parent=11 // pred_fallthru
          _
        // Predicated region
        $region33: #{tpu_custom_call.1} parent=11 // pred_check
          %p274 = pneg %p174
        $region34: #{tpu_custom_call.1} parent=11 // pred_check_branch
          %276 = sbr.rel (%p274) target = $region36
        $region35: #{tpu_custom_call.1} parent=11 // pred_region
          %278 = vsyncadd [#allocation12], 0
          %s280 = sshll.u32 %s6, 4
          %s281 = int_to_ptr.hbm [resolvable:$true] %s280
          %s282 = sshll.u32 [#allocation11], 4
          %s283 = int_to_ptr.vmem [resolvable:$true] %s282
          %285 = dma.hbm_to_vmem [thread:$0]  %s281, 128, %s283, [#allocation12]
        $region36: #{tpu_custom_call.1} parent=11 // pred_fallthru
          _
      $region12: #{tpu_custom_call.1} parent=5 // pred_fallthru
        _
      %p286 = scmp.lt.s32.totalorder %s22, 2
      // Predicated region
      $region37: #{tpu_custom_call.1} parent=5 // pred_check
        %p287 = pneg %p286
      $region38: #{tpu_custom_call.1} parent=5 // pred_check_branch
        %289 = sbr.rel (%p287) target = $region40
      $region39: #{tpu_custom_call.1} parent=5 // pred_region
        // Predicated region
        $region41: #{tpu_custom_call.1} parent=39 // pred_check
          %p290 = pneg %p42
        $region42: #{tpu_custom_call.1} parent=39 // pred_check_branch
          %292 = sbr.rel (%p290) target = $region44
        $region43: #{tpu_custom_call.1} parent=39 // pred_region
          %s293 = sand.u32 %s32, 1
          %s294 = scalar_lea.sflag [#allocation3], %s293
          %s295 = sand.u32 %s32, 1
          %s296 = smul.addr %s295, 8
          %s297 = scalar_lea.vmem [#allocation2], %s296
          %299 = vsyncadd %s294, 0
          %s300 = smul.addr %s22, 8
          %s301 = scalar_lea.hbm %s0, %s300
          %s303 = sshll.u32 %s301, 4
          %s304 = int_to_ptr.hbm [resolvable:$true] %s303
          %s305 = sshll.u32 %s297, 4
          %s306 = int_to_ptr.vmem [resolvable:$true] %s305
          %308 = dma.hbm_to_vmem [thread:$0]  %s304, 128, %s306, %s294
        $region44: #{tpu_custom_call.1} parent=39 // pred_fallthru
          _
      $region40: #{tpu_custom_call.1} parent=5 // pred_fallthru
        _
      %p309 = scmp.le.s32.totalorder 1, %s22
      %p310 = scmp.lt.s32.totalorder %s22, 3
      %p311 = pnand %p309, %p310
      %p312 = pneg %p311
      // Predicated region
      $region45: #{tpu_custom_call.1} parent=5 // pred_check
        _
      $region46: #{tpu_custom_call.1} parent=5 // pred_check_branch
        %314 = sbr.rel (%p311) target = $region48
      $region47: #{tpu_custom_call.1} parent=5 // pred_region
        %s315 = ssub.s32 %s22, 1
        %s316 = sand.u32 %s35, 1
        %s317 = scalar_lea.sflag [#allocation3], %s316
        %s318 = sand.u32 %s35, 1
        %s319 = smul.addr %s318, 8
        %s320 = scalar_lea.vmem [#allocation2], %s319
        // Predicated region
        $region49: #{tpu_custom_call.1} parent=47 // pred_check
          %p321 = pneg %p48
        $region50: #{tpu_custom_call.1} parent=47 // pred_check_branch
          %323 = sbr.rel (%p321) target = $region52
        $region51: #{tpu_custom_call.1} parent=47 // pred_region
          %325 = dma.done %s317, 128
        $region52: #{tpu_custom_call.1} parent=47 // pred_fallthru
          _
        // Predicated region
        $region53: #{tpu_custom_call.1} parent=47 // pred_check
          %p326 = pneg %p69
        $region54: #{tpu_custom_call.1} parent=47 // pred_check_branch
          %328 = sbr.rel (%p326) target = $region56
        $region55: #{tpu_custom_call.1} parent=47 // pred_region
          %330 = dma.done [#allocation6], 512
        $region56: #{tpu_custom_call.1} parent=47 // pred_fallthru
          _
        // Predicated region
        $region57: #{tpu_custom_call.1} parent=47 // pred_check
          %p331 = pneg %p90
        $region58: #{tpu_custom_call.1} parent=47 // pred_check_branch
          %333 = sbr.rel (%p331) target = $region60
        $region59: #{tpu_custom_call.1} parent=47 // pred_region
          %335 = dma.done [#allocation6], 512
        $region60: #{tpu_custom_call.1} parent=47 // pred_fallthru
          _
        // Predicated region
        $region61: #{tpu_custom_call.1} parent=47 // pred_check
          %p336 = pneg %p111
        $region62: #{tpu_custom_call.1} parent=47 // pred_check_branch
          %338 = sbr.rel (%p336) target = $region64
        $region63: #{tpu_custom_call.1} parent=47 // pred_region
          %340 = dma.done [#allocation9], 512
        $region64: #{tpu_custom_call.1} parent=47 // pred_fallthru
          _
        // Predicated region
        $region65: #{tpu_custom_call.1} parent=47 // pred_check
          %p341 = pneg %p153
        $region66: #{tpu_custom_call.1} parent=47 // pred_check_branch
          %343 = sbr.rel (%p341) target = $region68
        $region67: #{tpu_custom_call.1} parent=47 // pred_region
          %345 = dma.done [#allocation9], 512
        $region68: #{tpu_custom_call.1} parent=47 // pred_fallthru
          _
        // Predicated region
        $region69: #{tpu_custom_call.1} parent=47 // pred_check
          %p346 = pneg %p174
        $region70: #{tpu_custom_call.1} parent=47 // pred_check_branch
          %348 = sbr.rel (%p346) target = $region72
        $region71: #{tpu_custom_call.1} parent=47 // pred_region
          %350 = dma.done [#allocation12], 128
        $region72: #{tpu_custom_call.1} parent=47 // pred_fallthru
          _
        %s351 = sand.u32 %s35, 1
        %s352 = scalar_lea.sflag [#allocation3], %s351
        %s353 = sand.u32 %s35, 1
        %s354 = smul.addr %s353, 8
        %s355 = scalar_lea.vmem [#allocation2], %s354
        %p356 = pneg %p48
        %p357 = pneg %p45
        %p358 = pneg %p69
        %p359 = pneg %p66
        %p360 = pneg %p90
        %p361 = pneg %p87
        %p362 = pneg %p111
        %p363 = pneg %p108
        %p364 = pneg %p132
        %p365 = pneg %p129
        %p366 = pneg %p153
        %p367 = pneg %p150
        %p368 = pneg %p174
        %p369 = pneg %p171
        %p370 = pneg %p200
        %p371 = pneg %p197
        %s372 = sand.u32 %s187, 1
        %s373 = scalar_lea.sflag [#allocation4], %s372
        %s374 = sand.u32 %s187, 1
        %s375 = smul.addr %s374, 8
        %s376 = scalar_lea.vmem [#allocation13], %s375
        %v377 = vld [vmem:[%s320] sm:$0xff]
        %v378 = vld [vmem:[#allocation5] sm:$0xff]
        %v379 = vld [vmem:[#allocation5 + $0x8] sm:$0xff]
        %v380 = vld [vmem:[#allocation5 + $0x10] sm:$0xff]
        %v381 = vld [vmem:[#allocation5 + $0x18] sm:$0xff]
        %v382 = vld [vmem:[#allocation7] sm:$0xff]
        %v383 = vld [vmem:[#allocation7 + $0x8] sm:$0xff]
        %v384 = vld [vmem:[#allocation7 + $0x10] sm:$0xff]
        %v385 = vld [vmem:[#allocation7 + $0x18] sm:$0xff]
        %v386 = vld [vmem:[#allocation8] sm:$0xff]
        %v387 = vld [vmem:[#allocation8 + $0x8] sm:$0xff]
        %v388 = vld [vmem:[#allocation8 + $0x10] sm:$0xff]
        %v389 = vld [vmem:[#allocation8 + $0x18] sm:$0xff]
        %v390 = vld [vmem:[#allocation10] sm:$0xff]
        %v391 = vld [vmem:[#allocation10 + $0x8] sm:$0xff]
        %v392 = vld [vmem:[#allocation10 + $0x10] sm:$0xff]
        %v393 = vld [vmem:[#allocation10 + $0x18] sm:$0xff]
        %v394 = vld [vmem:[%s4] sm:$0x1]
        %v395 = vld [vmem:[#allocation11] sm:$0x7f]
        %v396 = vperm.slane %v395, 0
        %vm397 = vcmask 261120
        %v399 = vsel %vm397, %v377, 0
        %401 = vmatpush.msra.mxu0 0.0
        %402 = vmatpush.msra.mxu0 0.0
        %403 = vmatpush.msra.mxu0 0.0
        %404 = vmatpush.msra.mxu0 0.0
        %405 = vmatpush.msra.mxu0 0.0
        %406 = vmatpush.msra.mxu0 0.0
        %407 = vmatpush.msra.mxu0 0.0
        %408 = vmatpush.msra.mxu0 0.0
        %409 = vmatpush.msra.mxu0 0.0
        %410 = vmatpush.msra.mxu0 0.0
        %411 = vmatpush.msra.mxu0 0.0
        %412 = vmatpush.msra.mxu0 0.0
        %413 = vmatpush.msra.mxu0 %v381
        %414 = vmatpush.msra.mxu0 %v380
        %415 = vmatpush.msra.mxu0 %v379
        %416 = vmatpush.msra.mxu0 %v378
        %417 = vmatmul.f32.gmra.mxu0 %v399
        %v418 = vpop.f32.mrf.mxu0
        %v419 = vadd.f32 %v396, %v418
        %420 = vdwg.mxu0
        %v421 = vmul.f32 %v419, 0.35355338
        %vm422 = vcmask 64512
        %v424 = vsel %vm422, %v421, 0
        %v427 = vsel %vm422, %v419, 0
        %429 = vmatpush.xpose.msra.mxu0 0.0
        %430 = vmatpush.xpose.msra.mxu0 0.0
        %431 = vmatpush.xpose.msra.mxu0 0.0
        %432 = vmatpush.xpose.msra.mxu0 0.0
        %433 = vmatpush.xpose.msra.mxu0 0.0
        %434 = vmatpush.xpose.msra.mxu0 0.0
        %435 = vmatpush.xpose.msra.mxu0 0.0
        %436 = vmatpush.xpose.msra.mxu0 0.0
        %437 = vmatpush.xpose.msra.mxu0 0.0
        %438 = vmatpush.xpose.msra.mxu0 0.0
        %439 = vmatpush.xpose.msra.mxu0 0.0
        %440 = vmatpush.xpose.msra.mxu0 0.0
        %441 = vmatpush.xpose.msra.mxu0 0.0
        %442 = vmatpush.xpose.msra.mxu0 0.0
        %443 = vmatpush.xpose.msra.mxu0 0.0
        %444 = vmatpush.xpose.msra.mxu0 %v427
        %445 = vmatmul.f32.gmra.mxu0 %v424
        %v446 = vpop.f32.mrf.mxu0
        %v447 = vadd.f32 0.0, %v446
        %448 = vdwg.mxu0
        %v449 = vsel %vm422, %v447, -inf
        %450 = vmax.xlane.f32.xlu0 %v449
        %v451 = vpop.xlane.xlu0 %450
        %v452 = vsub.f32 %v447, %v451
        %v453 = vmul.f32 %v452, 1.442695
        %v454 = vpow.pop %v453
        %v455 = vsel %vm422, %v454, 0.0
        %456 = vadd.xlane.f32.xlu0 %v455
        %v457 = vpop.xlane.xlu0 %456
        %v458 = vrcp.pop %v457
        %v459 = vmul.f32 %v454, %v458
        %v461 = vsel %vm422, %v459, 0
        %463 = vmatpush.msra.mxu0 0.0
        %464 = vmatpush.msra.mxu0 0.0
        %465 = vmatpush.msra.mxu0 0.0
        %466 = vmatpush.msra.mxu0 0.0
        %467 = vmatpush.msra.mxu0 0.0
        %468 = vmatpush.msra.mxu0 0.0
        %469 = vmatpush.msra.mxu0 0.0
        %470 = vmatpush.msra.mxu0 0.0
        %471 = vmatpush.msra.mxu0 0.0
        %472 = vmatpush.msra.mxu0 0.0
        %473 = vmatpush.msra.mxu0 0.0
        %474 = vmatpush.msra.mxu0 0.0
        %475 = vmatpush.msra.mxu0 0.0
        %476 = vmatpush.msra.mxu0 0.0
        %477 = vmatpush.msra.mxu0 0.0
        %478 = vmatpush.msra.mxu0 %v419
        %479 = vmatmul.f32.gmra.mxu0 %v461
        %v480 = vpop.f32.mrf.mxu0
        %v481 = vadd.f32 0.0, %v480
        %482 = vdwg.mxu0
        %483 = vrot.lane.b32.xlu0 %v421, 120
        %v484 = vpop.permute.xlu0 %483
        %485 = vrot.lane.b32.xlu0 %v419, 120
        %v486 = vpop.permute.xlu0 %485
        %v487 = vsel %vm422, %v484, 0
        %v489 = vsel %vm422, %v486, 0
        %491 = vmatpush.xpose.msra.mxu0 0.0
        %492 = vmatpush.xpose.msra.mxu0 0.0
        %493 = vmatpush.xpose.msra.mxu0 0.0
        %494 = vmatpush.xpose.msra.mxu0 0.0
        %495 = vmatpush.xpose.msra.mxu0 0.0
        %496 = vmatpush.xpose.msra.mxu0 0.0
        %497 = vmatpush.xpose.msra.mxu0 0.0
        %498 = vmatpush.xpose.msra.mxu0 0.0
        %499 = vmatpush.xpose.msra.mxu0 0.0
        %500 = vmatpush.xpose.msra.mxu0 0.0
        %501 = vmatpush.xpose.msra.mxu0 0.0
        %502 = vmatpush.xpose.msra.mxu0 0.0
        %503 = vmatpush.xpose.msra.mxu0 0.0
        %504 = vmatpush.xpose.msra.mxu0 0.0
        %505 = vmatpush.xpose.msra.mxu0 0.0
        %506 = vmatpush.xpose.msra.mxu0 %v489
        %507 = vmatmul.f32.gmra.mxu0 %v487
        %v508 = vpop.f32.mrf.mxu0
        %v509 = vadd.f32 0.0, %v508
        %510 = vdwg.mxu0
        %v511 = vsel %vm422, %v509, -inf
        %512 = vmax.xlane.f32.xlu0 %v511
        %v513 = vpop.xlane.xlu0 %512
        %v514 = vsub.f32 %v509, %v513
        %v515 = vmul.f32 %v514, 1.442695
        %v516 = vpow.pop %v515
        %v517 = vsel %vm422, %v516, 0.0
        %518 = vadd.xlane.f32.xlu0 %v517
        %v519 = vpop.xlane.xlu0 %518
        %v520 = vrcp.pop %v519
        %v521 = vmul.f32 %v516, %v520
        %v524 = vsel %vm422, %v521, 0
        %526 = vmatpush.msra.mxu0 0.0
        %527 = vmatpush.msra.mxu0 0.0
        %528 = vmatpush.msra.mxu0 0.0
        %529 = vmatpush.msra.mxu0 0.0
        %530 = vmatpush.msra.mxu0 0.0
        %531 = vmatpush.msra.mxu0 0.0
        %532 = vmatpush.msra.mxu0 0.0
        %533 = vmatpush.msra.mxu0 0.0
        %534 = vmatpush.msra.mxu0 0.0
        %535 = vmatpush.msra.mxu0 0.0
        %536 = vmatpush.msra.mxu0 0.0
        %537 = vmatpush.msra.mxu0 0.0
        %538 = vmatpush.msra.mxu0 0.0
        %539 = vmatpush.msra.mxu0 0.0
        %540 = vmatpush.msra.mxu0 0.0
        %541 = vmatpush.msra.mxu0 %v486
        %542 = vmatmul.f32.gmra.mxu0 %v524
        %v543 = vpop.f32.mrf.mxu0
        %v544 = vadd.f32 0.0, %v543
        %545 = vdwg.mxu0
        %546 = vrot.lane.b32.xlu0 %v421, 112
        %v547 = vpop.permute.xlu0 %546
        %548 = vrot.lane.b32.xlu0 %v419, 112
        %v549 = vpop.permute.xlu0 %548
        %v550 = vsel %vm422, %v547, 0
        %v552 = vsel %vm422, %v549, 0
        %554 = vmatpush.xpose.msra.mxu0 0.0
        %555 = vmatpush.xpose.msra.mxu0 0.0
        %556 = vmatpush.xpose.msra.mxu0 0.0
        %557 = vmatpush.xpose.msra.mxu0 0.0
        %558 = vmatpush.xpose.msra.mxu0 0.0
        %559 = vmatpush.xpose.msra.mxu0 0.0
        %560 = vmatpush.xpose.msra.mxu0 0.0
        %561 = vmatpush.xpose.msra.mxu0 0.0
        %562 = vmatpush.xpose.msra.mxu0 0.0
        %563 = vmatpush.xpose.msra.mxu0 0.0
        %564 = vmatpush.xpose.msra.mxu0 0.0
        %565 = vmatpush.xpose.msra.mxu0 0.0
        %566 = vmatpush.xpose.msra.mxu0 0.0
        %567 = vmatpush.xpose.msra.mxu0 0.0
        %568 = vmatpush.xpose.msra.mxu0 0.0
        %569 = vmatpush.xpose.msra.mxu0 %v552
        %570 = vmatmul.f32.gmra.mxu0 %v550
        %v571 = vpop.f32.mrf.mxu0
        %v572 = vadd.f32 0.0, %v571
        %573 = vdwg.mxu0
        %v574 = vsel %vm422, %v572, -inf
        %575 = vmax.xlane.f32.xlu0 %v574
        %v576 = vpop.xlane.xlu0 %575
        %v577 = vsub.f32 %v572, %v576
        %v578 = vmul.f32 %v577, 1.442695
        %v579 = vpow.pop %v578
        %v580 = vsel %vm422, %v579, 0.0
        %581 = vadd.xlane.f32.xlu0 %v580
        %v582 = vpop.xlane.xlu0 %581
        %v583 = vrcp.pop %v582
        %v584 = vmul.f32 %v579, %v583
        %v587 = vsel %vm422, %v584, 0
        %589 = vmatpush.msra.mxu0 0.0
        %590 = vmatpush.msra.mxu0 0.0
        %591 = vmatpush.msra.mxu0 0.0
        %592 = vmatpush.msra.mxu0 0.0
        %593 = vmatpush.msra.mxu0 0.0
        %594 = vmatpush.msra.mxu0 0.0
        %595 = vmatpush.msra.mxu0 0.0
        %596 = vmatpush.msra.mxu0 0.0
        %597 = vmatpush.msra.mxu0 0.0
        %598 = vmatpush.msra.mxu0 0.0
        %599 = vmatpush.msra.mxu0 0.0
        %600 = vmatpush.msra.mxu0 0.0
        %601 = vmatpush.msra.mxu0 0.0
        %602 = vmatpush.msra.mxu0 0.0
        %603 = vmatpush.msra.mxu0 0.0
        %604 = vmatpush.msra.mxu0 %v549
        %605 = vmatmul.f32.gmra.mxu0 %v587
        %v606 = vpop.f32.mrf.mxu0
        %v607 = vadd.f32 0.0, %v606
        %608 = vdwg.mxu0
        %609 = vrot.lane.b32.xlu0 %v421, 104
        %v610 = vpop.permute.xlu0 %609
        %611 = vrot.lane.b32.xlu0 %v419, 104
        %v612 = vpop.permute.xlu0 %611
        %v613 = vsel %vm422, %v610, 0
        %v615 = vsel %vm422, %v612, 0
        %617 = vmatpush.xpose.msra.mxu0 0.0
        %618 = vmatpush.xpose.msra.mxu0 0.0
        %619 = vmatpush.xpose.msra.mxu0 0.0
        %620 = vmatpush.xpose.msra.mxu0 0.0
        %621 = vmatpush.xpose.msra.mxu0 0.0
        %622 = vmatpush.xpose.msra.mxu0 0.0
        %623 = vmatpush.xpose.msra.mxu0 0.0
        %624 = vmatpush.xpose.msra.mxu0 0.0
        %625 = vmatpush.xpose.msra.mxu0 0.0
        %626 = vmatpush.xpose.msra.mxu0 0.0
        %627 = vmatpush.xpose.msra.mxu0 0.0
        %628 = vmatpush.xpose.msra.mxu0 0.0
        %629 = vmatpush.xpose.msra.mxu0 0.0
        %630 = vmatpush.xpose.msra.mxu0 0.0
        %631 = vmatpush.xpose.msra.mxu0 0.0
        %632 = vmatpush.xpose.msra.mxu0 %v615
        %633 = vmatmul.f32.gmra.mxu0 %v613
        %v634 = vpop.f32.mrf.mxu0
        %v635 = vadd.f32 0.0, %v634
        %636 = vdwg.mxu0
        %v637 = vsel %vm422, %v635, -inf
        %638 = vmax.xlane.f32.xlu0 %v637
        %v639 = vpop.xlane.xlu0 %638
        %v640 = vsub.f32 %v635, %v639
        %v641 = vmul.f32 %v640, 1.442695
        %v642 = vpow.pop %v641
        %v643 = vsel %vm422, %v642, 0.0
        %644 = vadd.xlane.f32.xlu0 %v643
        %v645 = vpop.xlane.xlu0 %644
        %v646 = vrcp.pop %v645
        %v647 = vmul.f32 %v642, %v646
        %v650 = vsel %vm422, %v647, 0
        %652 = vmatpush.msra.mxu0 0.0
        %653 = vmatpush.msra.mxu0 0.0
        %654 = vmatpush.msra.mxu0 0.0
        %655 = vmatpush.msra.mxu0 0.0
        %656 = vmatpush.msra.mxu0 0.0
        %657 = vmatpush.msra.mxu0 0.0
        %658 = vmatpush.msra.mxu0 0.0
        %659 = vmatpush.msra.mxu0 0.0
        %660 = vmatpush.msra.mxu0 0.0
        %661 = vmatpush.msra.mxu0 0.0
        %662 = vmatpush.msra.mxu0 0.0
        %663 = vmatpush.msra.mxu0 0.0
        %664 = vmatpush.msra.mxu0 0.0
        %665 = vmatpush.msra.mxu0 0.0
        %666 = vmatpush.msra.mxu0 0.0
        %667 = vmatpush.msra.mxu0 %v612
        %668 = vmatmul.f32.gmra.mxu0 %v650
        %v669 = vpop.f32.mrf.mxu0
        %v670 = vadd.f32 0.0, %v669
        %671 = vdwg.mxu0
        %673 = vrot.lane.b32.xlu0 %v544, 8
        %v674 = vpop.permute.xlu0 %673
        %677 = vrot.lane.b32.xlu0 %v607, 16
        %v678 = vpop.permute.xlu0 %677
        %681 = vrot.lane.b32.xlu0 %v670, 24
        %v682 = vpop.permute.xlu0 %681
        %v684 = vsel %vm422, %v481, %v674
        %vm685 = vcmask 130048
        %v686 = vsel %vm685, %v684, %v678
        %vm687 = vcmask 195584
        %v688 = vsel %vm687, %v686, %v682
        %v689 = vperm.slane %v395, 1
        %v691 = vsel %vm397, %v688, 0
        %693 = vmatpush.msra.mxu0 0.0
        %694 = vmatpush.msra.mxu0 0.0
        %695 = vmatpush.msra.mxu0 0.0
        %696 = vmatpush.msra.mxu0 0.0
        %697 = vmatpush.msra.mxu0 0.0
        %698 = vmatpush.msra.mxu0 0.0
        %699 = vmatpush.msra.mxu0 0.0
        %700 = vmatpush.msra.mxu0 0.0
        %701 = vmatpush.msra.mxu0 0.0
        %702 = vmatpush.msra.mxu0 0.0
        %703 = vmatpush.msra.mxu0 0.0
        %704 = vmatpush.msra.mxu0 0.0
        %705 = vmatpush.msra.mxu0 %v385
        %706 = vmatpush.msra.mxu0 %v384
        %707 = vmatpush.msra.mxu0 %v383
        %708 = vmatpush.msra.mxu0 %v382
        %709 = vmatmul.f32.gmra.mxu0 %v691
        %v710 = vpop.f32.mrf.mxu0
        %v711 = vadd.f32 %v689, %v710
        %712 = vdwg.mxu0
        %v713 = vadd.f32 %v711, %v377
        %v714 = vsel %vm397, %v713, 0.0
        %715 = vadd.xlane.f32.xlu0 %v714
        %v716 = vpop.xlane.xlu0 %715
        %v717 = vrcp.pop 32.0
        %v718 = vmul.f32 32.0, %v717
        %v719 = vsub.f32 1.0, %v718
        %v720 = vmul.f32 %v717, %v719
        %v721 = vadd.f32 %v717, %v720
        %vm722 = vweird.f32 %v717
        %v723 = vsel %vm722, %v717, %v721
        %v724 = vmul.f32 %v716, %v723
        %v725 = vsub.f32 %v713, %v724
        %v726 = vmul.f32 %v725, %v725
        %v727 = vsel %vm397, %v726, 0.0
        %728 = vadd.xlane.f32.xlu0 %v727
        %v729 = vpop.xlane.xlu0 %728
        %v730 = vmul.f32 %v729, %v723
        %v731 = vadd.f32 %v730, 1e-05
        %v732 = vrsqrt.pop %v731
        %v733 = vmul.f32 %v732, %v731
        %v734 = vmul.f32 %v733, %v732
        %v735 = vmul.f32 0.5, %v734
        %v736 = vsub.f32 1.5, %v735
        %v737 = vmul.f32 %v732, %v736
        %vm738 = vweird.f32 %v731
        %vm739 = vweird.f32 %v732
        %vm740 = vmor %vm738, %vm739
        %v741 = vsel %vm740, %v732, %v737
        %v742 = vmul.f32 %v725, %v741
        %v743 = vperm.slane %v395, 2
        %v744 = vmul.f32 %v742, %v743
        %v745 = vperm.slane %v395, 3
        %v746 = vadd.f32 %v744, %v745
        %v748 = vperm.slane %v394, 0
        %v751 = vsel %vm397, %v746, 0
        %753 = vmatpush.msra.mxu0 0.0
        %754 = vmatpush.msra.mxu0 0.0
        %755 = vmatpush.msra.mxu0 0.0
        %756 = vmatpush.msra.mxu0 0.0
        %757 = vmatpush.msra.mxu0 0.0
        %758 = vmatpush.msra.mxu0 0.0
        %759 = vmatpush.msra.mxu0 0.0
        %760 = vmatpush.msra.mxu0 0.0
        %761 = vmatpush.msra.mxu0 0.0
        %762 = vmatpush.msra.mxu0 0.0
        %763 = vmatpush.msra.mxu0 0.0
        %764 = vmatpush.msra.mxu0 0.0
        %765 = vmatpush.msra.mxu0 %v389
        %766 = vmatpush.msra.mxu0 %v388
        %767 = vmatpush.msra.mxu0 %v387
        %768 = vmatpush.msra.mxu0 %v386
        %769 = vmatmul.f32.gmra.mxu0 %v751
        %v770 = vpop.f32.mrf.mxu0
        %v771 = vadd.f32 %v748, %v770
        %772 = vdwg.mxu0
        %v773 = vmul.f32 %v771, 0.5
        %v774 = vmul.f32 %v771, 0.70710677
        %v775 = vmul.f32 %v774, %v774
        %v776 = vmin.f32 16.0, %v775
        %v777 = vmul.f32 %v776, 2.1237322e-06
        %v778 = vadd.f32 %v777, 0.00028619796
        %v779 = vmul.f32 %v776, %v778
        %v780 = vadd.f32 %v779, 0.0036580483
        %v781 = vmul.f32 %v776, %v780
        %v782 = vadd.f32 %v781, 0.05243302
        %v783 = vmul.f32 %v776, %v782
        %v784 = vadd.f32 %v783, 0.18741608
        %v785 = vmul.f32 %v776, %v784
        %v786 = vadd.f32 %v785, 1.1283791
        %v787 = vmul.f32 %v774, %v786
        %v788 = vmul.f32 %v776, 3.8918573e-05
        %v789 = vadd.f32 %v788, 0.001143296
        %v790 = vmul.f32 %v776, %v789
        %v791 = vadd.f32 %v790, 0.014752088
        %v792 = vmul.f32 %v776, %v791
        %v793 = vadd.f32 %v792, 0.112945676
        %v794 = vmul.f32 %v776, %v793
        %v795 = vadd.f32 %v794, 0.4994258
        %v796 = vmul.f32 %v776, %v795
        %v797 = vadd.f32 %v796, 1.0
        %v798 = vrcp.pop %v797
        %v799 = vmul.f32 %v797, %v798
        %v800 = vsub.f32 1.0, %v799
        %v801 = vmul.f32 %v798, %v800
        %v802 = vadd.f32 %v798, %v801
        %vm803 = vweird.f32 %v797
        %vm804 = vweird.f32 %v798
        %vm805 = vmor %vm803, %vm804
        %v806 = vsel %vm805, %v798, %v802
        %v807 = vand.u32 2147483647, %v797
        %vm808 = vcmp.eq.f32.partialorder %v807, 8.507059e+37
        %v809 = vand.u32 %v797, 2147483648
        %v810 = vor.u32 1.1754944e-38, %v809
        %v811 = vsel %vm808, %v810, %v806
        %v812 = vmul.f32 %v787, %v811
        %v813 = vmin.f32 %v812, 1.0
        %v814 = vmax.f32 %v813, -1.0
        %v815 = vadd.f32 %v814, 1.0
        %v816 = vmul.f32 %v773, %v815
        %v817 = vperm.slane %v395, 4
        %v819 = vsel %vm397, %v816, 0
        %821 = vmatpush.msra.mxu0 0.0
        %822 = vmatpush.msra.mxu0 0.0
        %823 = vmatpush.msra.mxu0 0.0
        %824 = vmatpush.msra.mxu0 0.0
        %825 = vmatpush.msra.mxu0 0.0
        %826 = vmatpush.msra.mxu0 0.0
        %827 = vmatpush.msra.mxu0 0.0
        %828 = vmatpush.msra.mxu0 0.0
        %829 = vmatpush.msra.mxu0 0.0
        %830 = vmatpush.msra.mxu0 0.0
        %831 = vmatpush.msra.mxu0 0.0
        %832 = vmatpush.msra.mxu0 0.0
        %833 = vmatpush.msra.mxu0 %v393
        %834 = vmatpush.msra.mxu0 %v392
        %835 = vmatpush.msra.mxu0 %v391
        %836 = vmatpush.msra.mxu0 %v390
        %837 = vmatmul.f32.gmra.mxu0 %v819
        %v838 = vpop.f32.mrf.mxu0
        %v839 = vadd.f32 %v817, %v838
        %840 = vdwg.mxu0
        %v841 = vadd.f32 %v839, %v746
        %v842 = vsel %vm397, %v841, 0.0
        %843 = vadd.xlane.f32.xlu0 %v842
        %v844 = vpop.xlane.xlu0 %843
        %v845 = vmul.f32 %v844, %v723
        %v846 = vsub.f32 %v841, %v845
        %v847 = vmul.f32 %v846, %v846
        %v848 = vsel %vm397, %v847, 0.0
        %849 = vadd.xlane.f32.xlu0 %v848
        %v850 = vpop.xlane.xlu0 %849
        %v851 = vmul.f32 %v850, %v723
        %v852 = vadd.f32 %v851, 1e-05
        %v853 = vrsqrt.pop %v852
        %v854 = vmul.f32 %v853, %v852
        %v855 = vmul.f32 %v854, %v853
        %v856 = vmul.f32 0.5, %v855
        %v857 = vsub.f32 1.5, %v856
        %v858 = vmul.f32 %v853, %v857
        %vm859 = vweird.f32 %v852
        %vm860 = vweird.f32 %v853
        %vm861 = vmor %vm859, %vm860
        %v862 = vsel %vm861, %v853, %v858
        %v863 = vmul.f32 %v846, %v862
        %v864 = vperm.slane %v395, 5
        %v865 = vmul.f32 %v863, %v864
        %v866 = vperm.slane %v395, 6
        %v867 = vadd.f32 %v865, %v866
        %868 = vst.msk [vmem:[%s376] sm:$0xff] %vm397, %v867
        %s869 = sand.u32 %s187, 1
        %s870 = scalar_lea.sflag [#allocation4], %s869
        %s871 = sand.u32 %s187, 1
        %s872 = smul.addr %s871, 8
        %s873 = scalar_lea.vmem [#allocation13], %s872
        // Predicated region
        $region73: #{tpu_custom_call.1} parent=47 // pred_check
          %p874 = pneg %p197
        $region74: #{tpu_custom_call.1} parent=47 // pred_check_branch
          %876 = sbr.rel (%p874) target = $region76
        $region75: #{tpu_custom_call.1} parent=47 // pred_region
          %878 = vsyncadd %s870, 0
          %s879 = smul.addr %s27, 8
          %s880 = scalar_lea.hbm %s7, %s879
          %s882 = sshll.u32 %s873, 4
          %s883 = int_to_ptr.vmem [resolvable:$true] %s882
          %s884 = sshll.u32 %s880, 4
          %s885 = int_to_ptr.hbm [resolvable:$true] %s884
          %887 = dma.vmem_to_hbm [thread:$0]  %s883, 128, %s885, %s870
        $region76: #{tpu_custom_call.1} parent=47 // pred_fallthru
          _
      $region48: #{tpu_custom_call.1} parent=5 // pred_fallthru
        _
      %p888 = scmp.le.s32.totalorder 2, %s22
      // Predicated region
      $region77: #{tpu_custom_call.1} parent=5 // pred_check
        %p889 = pneg %p888
      $region78: #{tpu_custom_call.1} parent=5 // pred_check_branch
        %891 = sbr.rel (%p889) target = $region80
      $region79: #{tpu_custom_call.1} parent=5 // pred_region
        %s892 = ssub.s32 %s22, 2
        // Predicated region
        $region81: #{tpu_custom_call.1} parent=79 // pred_check
          %p893 = pneg %p203
        $region82: #{tpu_custom_call.1} parent=79 // pred_check_branch
          %895 = sbr.rel (%p893) target = $region84
        $region83: #{tpu_custom_call.1} parent=79 // pred_region
          %s896 = sand.u32 %s188, 1
          %s897 = scalar_lea.sflag [#allocation4], %s896
          %s898 = sand.u32 %s188, 1
          %s899 = smul.addr %s898, 8
          %s900 = scalar_lea.vmem [#allocation13], %s899
          %902 = dma.done %s897, 128
        $region84: #{tpu_custom_call.1} parent=79 // pred_fallthru
          _
      $region80: #{tpu_custom_call.1} parent=5 // pred_fallthru
        _
    $region6: #{tpu_custom_call.1} parent=1 // loop_footer
      %s26 = sadd.s32 1, %s22
    $region7: #{tpu_custom_call.1} parent=1 // loop_footer_branch
      %21 = sbr.rel target = $region3
    $region8: #{tpu_custom_call.1} parent=1 // loop_exit
      _
    %903 = vsyncpa [#allocation3], 1
    %s904 = scalar_lea.sflag [#allocation3], 1
    %905 = vsyncpa %s904, 1
    %906 = vsyncpa [#allocation6], 1
    %907 = vsyncpa [#allocation9], 1
    %908 = vsyncpa [#allocation12], 1
    %909 = vsyncpa [#allocation4], 1
    %s910 = scalar_lea.sflag [#allocation4], 1
    %911 = vsyncpa %s910, 1

</llo_original>
